<compile_context>
chip_gen: v7x
topology: tpu7x:2x2x1
jax: 0.10.0
libtpu: 0.0.40
codegen_flags: <defaults>
</compile_context>

<pallas_src>
import functools

import jax
import jax.numpy as jnp
from jax.experimental import pallas as pl
from jax.experimental.pallas import tpu as pltpu


# ------------------------------- helpers ------------------------------------

def _round_up(x, m):
    return ((x + m - 1) // m) * m


def _cdiv(a, b):
    return -(-a // b)


def _vmem_limit_bytes():
    """Per-generation VMEM budget: ~3/4 of physical, capped at 100 MiB.
    v5e/v6e (128 MiB) -> 96 MiB; v7x (64 MiB) -> 48 MiB; fallback 48 MiB (legal everywhere)."""
    try:
        cap = int(pltpu.get_tpu_info().vmem_capacity_bytes)
    except Exception:
        cap = 64 * 1024 * 1024
    return min((cap * 3) // 4, 100 * 1024 * 1024)


def _choose_tile(n, preferred, align, min_tiles=1):
    """Tile size: multiple of `align`, <= preferred, and (when n allows) >= min_tiles tiles
    so the 'parallel' axis can be split across both v7x TensorCores."""
    n_al = _round_up(max(n, align), align)
    t = _round_up(min(preferred, n_al), align)
    if min_tiles > 1 and n_al >= min_tiles * align and _cdiv(n_al, t) < min_tiles:
        t = _round_up(_cdiv(n_al, min_tiles), align)
    return t


def _gelu_tanh(h):
    # tanh-approximate GELU (EUP-friendly).
    # TODO(synk): PyTorch nn.GELU default is erf-based; tanh approx differs by ~1e-3 rel.
    return 0.5 * h * (1.0 + jnp.tanh(0.7978845608028654 * (h + 0.044715 * h * h * h)))


# ----------------------------- Pallas kernels ------------------------------

def ffn_stack_kernel(x_ref, gamma_ref, beta_ref, w1_ref, b1_ref, w2_ref, b2_ref, o_ref,
                     *, weights_resident):
    """Fused stack of pre-LN FFN blocks.

    Grid = (M_tiles, L).  o_ref is the VMEM-resident activation block (block index constant
    over the layer axis).  gamma/beta/b1/b2 are full [L,...] resident blocks indexed with
    `layer`; W1/W2 are either fully resident ([L,D,F]) or streamed per layer ([1,D,F]).
    """
    layer = pl.program_id(1)

    @pl.when(layer == 0)
    def _():
        o_ref[...] = x_ref[...]                    # seed the resident activation

    x = o_ref[...]                                 # (TM, D) f32, already in VMEM
    # --- LayerNorm (fp32 VPU math) ---
    mean = jnp.mean(x, axis=-1, keepdims=True)
    xc = x - mean
    var = jnp.mean(xc * xc, axis=-1, keepdims=True)
    ln = xc * jax.lax.rsqrt(var + 1e-5) * gamma_ref[layer] + beta_ref[layer]
    # --- FFN: bf16 matmuls on the MXU, fp32 accumulation ---
    if weights_resident:
        w1 = w1_ref[layer]
        w2 = w2_ref[layer]
    else:
        w1 = w1_ref[0]
        w2 = w2_ref[0]
    h = jnp.dot(ln.astype(jnp.bfloat16), w1,
                preferred_element_type=jnp.float32) + b1_ref[layer]
    h = _gelu_tanh(h)
    y = jnp.dot(h.astype(jnp.bfloat16), w2,
                preferred_element_type=jnp.float32) + b2_ref[layer]
    # --- residual, keep activation resident ---
    o_ref[...] = x + y


def head_kernel(x_ref, w_ref, b_ref, o_ref):
    """Output linear head tile: o = x @ W + b (bf16 matmul, fp32 accumulate)."""
    o_ref[...] = (
        jnp.dot(x_ref[...].astype(jnp.bfloat16), w_ref[...],
                preferred_element_type=jnp.float32)
        + b_ref[...]
    ).astype(o_ref.dtype)


# ------------------------------ call wrappers -------------------------------

@functools.partial(jax.jit, static_argnames=("tm", "weights_resident", "vmem_limit"))
def _ffn_stack_call(x, gamma, beta, w1, b1, w2, b2, *, tm, weights_resident, vmem_limit):
    M, D = x.shape
    L, _, F = w1.shape
    grid = (M // tm, L)

    if weights_resident:
        # Fetched exactly once per shard call; stays resident across M tiles and layers.
        w1_spec = pl.BlockSpec((L, D, F), lambda i, l: (0, 0, 0))
        w2_spec = pl.BlockSpec((L, F, D), lambda i, l: (0, 0, 0))
    else:
        # Streamed per layer (double-buffered by the pipeline).
        # TODO(synk): on v7x with real transformer sizes (D=4096, F=16384) even a single
        # (1,D,F) bf16 block exceeds 64 MiB; an additional F/D tiling axis with an fp32
        # accumulator would be needed there.
        w1_spec = pl.BlockSpec((1, D, F), lambda i, l: (l, 0, 0))
        w2_spec = pl.BlockSpec((1, F, D), lambda i, l: (l, 0, 0))

    kernel = functools.partial(ffn_stack_kernel, weights_resident=weights_resident)

    return pl.pallas_call(
        kernel,
        out_shape=jax.ShapeDtypeStruct((M, D), jnp.float32),
        grid_spec=pltpu.PrefetchScalarGridSpec(
            num_scalar_prefetch=0,
            grid=grid,
            in_specs=[
                pl.BlockSpec((tm, D), lambda i, l: (i, 0)),       # x (fetched once per M tile)
                pl.BlockSpec((L, 1, D), lambda i, l: (0, 0, 0)),  # gamma (resident, all L)
                pl.BlockSpec((L, 1, D), lambda i, l: (0, 0, 0)),  # beta
                w1_spec,                                          # W1 (bf16)
                pl.BlockSpec((L, 1, F), lambda i, l: (0, 0, 0)),  # b1 (resident, all L)
                w2_spec,                                          # W2 (bf16)
                pl.BlockSpec((L, 1, D), lambda i, l: (0, 0, 0)),  # b2 (resident, all L)
            ],
            # Constant over the layer axis -> activation stays in VMEM across layers.
            out_specs=pl.BlockSpec((tm, D), lambda i, l: (i, 0)),
        ),
        compiler_params=pltpu.CompilerParams(
            dimension_semantics=("parallel", "arbitrary"),
            vmem_limit_bytes=vmem_limit,
        ),
    )(x, gamma, beta, w1, b1, w2, b2)


def ffn_stack(x, p, *, vmem_limit):
    """Apply L stacked FFN blocks to x:[M, D], padding M so no rows are dropped."""
    M, D = x.shape
    L, _, F = p["w1"].shape
    # Large M tiles, but guarantee >=2 tiles when M>=16 (v7x megacore).
    tm = _choose_tile(M, preferred=512, align=8, min_tiles=2)
    Mp = _round_up(max(M, 8), tm)
    xp = jnp.pad(x, ((0, Mp - M), (0, 0))) if Mp != M else x
    # Keep the whole stacked weight set resident when it fits comfortably in the budget.
    stacked_weight_bytes = 2 * L * D * F * 2  # W1 + W2, bf16
    weights_resident = stacked_weight_bytes <= vmem_limit // 3
    out = _ffn_stack_call(xp, p["gamma"], p["beta"], p["w1"], p["b1"], p["w2"], p["b2"],
                          tm=tm, weights_resident=weights_resident, vmem_limit=vmem_limit)
    return out[:M] if Mp != M else out


@functools.partial(jax.jit, static_argnames=("tm", "tn", "vmem_limit"))
def _linear_head_call(x, w, b, *, tm, tn, vmem_limit):
    M, D = x.shape
    V = w.shape[1]
    # Vocab axis OUTER: each W[D, tn] tile is streamed exactly once and stays resident
    # while the small x[M, D] tiles cycle on the inner axis.
    grid = (V // tn, M // tm)
    return pl.pallas_call(
        head_kernel,
        out_shape=jax.ShapeDtypeStruct((M, V), jnp.float32),
        grid_spec=pltpu.PrefetchScalarGridSpec(
            num_scalar_prefetch=0,
            grid=grid,
            in_specs=[
                pl.BlockSpec((tm, D), lambda j, i: (i, 0)),   # x tile (inner axis)
                pl.BlockSpec((D, tn), lambda j, i: (0, j)),   # bf16 weight tile (outer axis only)
                pl.BlockSpec((1, tn), lambda j, i: (0, j)),   # bias tile
            ],
            out_specs=pl.BlockSpec((tm, tn), lambda j, i: (i, j)),  # lane-dense output
        ),
        compiler_params=pltpu.CompilerParams(
            dimension_semantics=("parallel", "parallel"),
            vmem_limit_bytes=vmem_limit,
        ),
    )(x, w, b)


def linear_head(x, w, b, *, vmem_limit):
    """o[M, V] = x[M, D] @ W[D, V] + b[1, V], tiled over (V outer, M inner), padded tails."""
    M, D = x.shape
    V = w.shape[1]
    tm = _choose_tile(M, preferred=256, align=8, min_tiles=2)
    tn = _choose_tile(V, preferred=512, align=128, min_tiles=1)
    Mp = _round_up(max(M, 8), tm)
    Vp = _round_up(max(V, 128), tn)
    xp = jnp.pad(x, ((0, Mp - M), (0, 0))) if Mp != M else x
    wp = jnp.pad(w, ((0, 0), (0, Vp - V))) if Vp != V else w
    bp = jnp.pad(b, ((0, 0), (0, Vp - V))) if Vp != V else b
    out = _linear_head_call(xp, wp, bp, tm=tm, tn=tn, vmem_limit=vmem_limit)
    return out[:M, :V]


# --------------------------- ShardTransformer glue -------------------------

def default_arg_fn(output, args, kwargs):
    # next layer / shard consumes the previous output
    return (output,), kwargs


class ShardJAX:
    """Equivalent of Shard: applies its layer stack, threading args via arg_fn.

    The layer stack is fused into a single pallas_call (stacked weights).
    TODO(synk): a non-default arg_fn that re-packs outputs BETWEEN layers would require
    un-fusing back to per-layer calls; the default arg_fn is pure output threading.
    """

    def __init__(self, stacked_params, arg_fn, vmem_limit):
        self.p = stacked_params
        self.arg_fn = arg_fn
        self.vmem_limit = vmem_limit

    def __call__(self, *args, **kwargs):
        x = args[0]
        output = ffn_stack(x, self.p, vmem_limit=self.vmem_limit)
        args, kwargs = self.arg_fn(output, args, kwargs)
        return args, kwargs


class ShardTransformerJAX:
    """Equivalent of ShardTransformer.forward (to_float=True; inference path)."""

    def __init__(self, shards, output_layer):
        self.vmem_limit = _vmem_limit_bytes()
        self.shards = [ShardJAX(s["shard"], s["arg_fn"], self.vmem_limit) for s in shards]
        self.output_layer_params = output_layer["layer"]
        self.output_layer_fn = output_layer["fn"]
        # TODO(synk): gradient checkpointing / per-shard device placement / tqdm logging are
        # pipeline-orchestration concerns with no kernel-level equivalent here.

    def forward(self, *args, **kwargs):
        for shard in self.shards:
            # convert_args: fp32 cast + device move -> numerically identity here
            args = tuple(a.astype(jnp.float32) if isinstance(a, jnp.ndarray) else a
                         for a in args)
            args, kwargs = shard(*args, **kwargs)
        x = self.output_layer_fn(args, kwargs)
        w, b = self.output_layer_params
        return linear_head(x, w, b, vmem_limit=self.vmem_limit)


# ------------------------------ param building -----------------------------

def make_shard_params(key, n_layers, hidden, ffn):
    """Stacked (fused) per-shard params.  Matmul weights stored in bf16 (MXU-native).
    TODO(synk): PyTorch Linear weights are fp32; bf16 storage is an intentional TPU choice."""
    w1s, w2s = [], []
    for _ in range(n_layers):
        key, k1, k2 = jax.random.split(key, 3)
        w1s.append(jax.random.normal(k1, (hidden, ffn), jnp.float32) * 0.05)
        w2s.append(jax.random.normal(k2, (ffn, hidden), jnp.float32) * 0.05)
    return {
        "gamma": jnp.ones((n_layers, 1, hidden), jnp.float32),
        "beta": jnp.zeros((n_layers, 1, hidden), jnp.float32),
        "w1": jnp.stack(w1s).astype(jnp.bfloat16),
        "b1": jnp.zeros((n_layers, 1, ffn), jnp.float32),
        "w2": jnp.stack(w2s).astype(jnp.bfloat16),
        "b2": jnp.zeros((n_layers, 1, hidden), jnp.float32),
    }, key


# ------------------------------ pure-JAX reference --------------------------

def _reference_forward(x2d, shard_params_list, w_out, b_out):
    x = x2d
    for p in shard_params_list:
        L = p["w1"].shape[0]
        for l in range(L):
            mean = jnp.mean(x, axis=-1, keepdims=True)
            xc = x - mean
            var = jnp.mean(xc * xc, axis=-1, keepdims=True)
            ln = xc * jax.lax.rsqrt(var + 1e-5) * p["gamma"][l] + p["beta"][l]
            h = jnp.dot(ln.astype(jnp.bfloat16), p["w1"][l],
                        preferred_element_type=jnp.float32) + p["b1"][l]
            h = _gelu_tanh(h)
            y = jnp.dot(h.astype(jnp.bfloat16), p["w2"][l],
                        preferred_element_type=jnp.float32) + p["b2"][l]
            x = x + y
    return jnp.dot(x.astype(jnp.bfloat16), w_out,
                   preferred_element_type=jnp.float32) + b_out


if __name__ == "__main__":
    # small but lane-dense shapes: batch=2, seq=8, hidden=128, ffn=256, vocab=256
    B, S, D, F, V = 2, 8, 128, 256, 256
    N_SHARDS, LAYERS_PER_SHARD = 2, 2

    key = jax.random.PRNGKey(0)
    key, xkey, hkey = jax.random.split(key, 3)

    # build shards (deterministic synthetic weights, stacked per shard for fusion)
    shards = []
    shard_params_list = []
    for _ in range(N_SHARDS):
        key, sub = jax.random.split(key)
        p, _ = make_shard_params(sub, LAYERS_PER_SHARD, D, F)
        shard_params_list.append(p)
        shards.append({"shard": p, "arg_fn": default_arg_fn})

    w_out = (jax.random.normal(hkey, (D, V), jnp.float32) * 0.05).astype(jnp.bfloat16)
    b_out = jnp.zeros((1, V), jnp.float32)
    output_layer = {"layer": (w_out, b_out), "fn": lambda args, kwargs: args[0]}

    model = ShardTransformerJAX(shards, output_layer)

    # input activation: [batch, seq, hidden] flattened to [M, D] for the kernels
    x = jax.random.normal(xkey, (B, S, D), jnp.float32)
    x2d = x.reshape(B * S, D)

    logits2d = model.forward(x2d)
    logits = logits2d.reshape(B, S, V)
    jax.block_until_ready(logits)

    # correctness vs pure-JAX reference (same bf16 weight casts)
    ref = _reference_forward(x2d, shard_params_list, w_out, b_out).reshape(B, S, V)
    assert logits.shape == (B, S, V) and logits.dtype == jnp.float32
    assert jnp.allclose(logits, ref, rtol=2e-2, atol=2e-2), "mismatch vs reference"
    print("KERNEL_OK")
</pallas_src>

<mosaic_0001>
module attributes {stable_mosaic.version = 11 : i64} {
  func.func @ffn_stack_kernel(%arg0: i32, %arg1: i32, %arg2: memref<8x128xf32, #tpu.memory_space<vmem>>, %arg3: memref<2x1x128xf32, #tpu.memory_space<vmem>>, %arg4: memref<2x1x128xf32, #tpu.memory_space<vmem>>, %arg5: memref<2x128x256xbf16, #tpu.memory_space<vmem>>, %arg6: memref<2x1x256xf32, #tpu.memory_space<vmem>>, %arg7: memref<2x256x128xbf16, #tpu.memory_space<vmem>>, %arg8: memref<2x1x128xf32, #tpu.memory_space<vmem>>, %arg9: memref<8x128xf32, #tpu.memory_space<vmem>>) attributes {dimension_semantics = [#tpu.dimension_semantics<parallel>, #tpu.dimension_semantics<arbitrary>], iteration_bounds = array<i64: 2, 2>, scalar_prefetch = 0 : i64, scratch_operands = 0 : i64, tpu.core_type = #tpu.core_type<tc>, window_params = [{transform_indices = @transform_0, window_bounds = array<i64: 8, 128>}, {pipeline_mode = #tpu.pipeline_mode<synchronous>, transform_indices = @transform_1, window_bounds = array<i64: 2, 1, 128>}, {pipeline_mode = #tpu.pipeline_mode<synchronous>, transform_indices = @transform_2, window_bounds = array<i64: 2, 1, 128>}, {pipeline_mode = #tpu.pipeline_mode<synchronous>, transform_indices = @transform_3, window_bounds = array<i64: 2, 128, 256>}, {pipeline_mode = #tpu.pipeline_mode<synchronous>, transform_indices = @transform_4, window_bounds = array<i64: 2, 1, 256>}, {pipeline_mode = #tpu.pipeline_mode<synchronous>, transform_indices = @transform_5, window_bounds = array<i64: 2, 256, 128>}, {pipeline_mode = #tpu.pipeline_mode<synchronous>, transform_indices = @transform_6, window_bounds = array<i64: 2, 1, 128>}, {transform_indices = @transform_7, window_bounds = array<i64: 8, 128>}]} {
    %c0_i32 = arith.constant 0 : i32
    %0 = arith.cmpi eq, %arg1, %c0_i32 : i32
    %1 = arith.extui %0 : i1 to i32
    %c0_i32_0 = arith.constant 0 : i32
    %2 = arith.cmpi ne, %1, %c0_i32_0 : i32
    scf.if %2 {
      %c0_26 = arith.constant 0 : index
      %c0_27 = arith.constant 0 : index
      %65 = vector.load %arg2[%c0_26, %c0_27] : memref<8x128xf32, #tpu.memory_space<vmem>>, vector<8x128xf32>
      %c0_28 = arith.constant 0 : index
      %c0_29 = arith.constant 0 : index
      %66 = vector.load %arg9[%c0_28, %c0_29] : memref<8x128xf32, #tpu.memory_space<vmem>>, vector<8x128xf32>
      tpu.vector_store %arg9[%c0_28, %c0_29], %65 {strides = array<i32>} : memref<8x128xf32, #tpu.memory_space<vmem>>, vector<8x128xf32>,
    } else {
    }
    %c0 = arith.constant 0 : index
    %c0_1 = arith.constant 0 : index
    %3 = vector.load %arg9[%c0, %c0_1] : memref<8x128xf32, #tpu.memory_space<vmem>>, vector<8x128xf32>
    %cst = arith.constant dense<0.000000e+00> : vector<8xf32>
    %4 = vector.multi_reduction <add>, %3, %cst [1] : vector<8x128xf32> to vector<8xf32>
    %5 = vector.shape_cast %4 : vector<8xf32> to vector<8x1xf32>
    %cst_2 = arith.constant 1.280000e+02 : f32
    %6 = vector.broadcast %cst_2 : f32 to vector<8x1xf32>
    %7 = arith.divf %5, %6 : vector<8x1xf32>
    %8 = vector.broadcast %7 : vector<8x1xf32> to vector<8x128xf32>
    %9 = arith.subf %3, %8 : vector<8x128xf32>
    %10 = arith.mulf %9, %9 : vector<8x128xf32>
    %cst_3 = arith.constant dense<0.000000e+00> : vector<8xf32>
    %11 = vector.multi_reduction <add>, %10, %cst_3 [1] : vector<8x128xf32> to vector<8xf32>
    %12 = vector.shape_cast %11 : vector<8xf32> to vector<8x1xf32>
    %cst_4 = arith.constant 1.280000e+02 : f32
    %13 = vector.broadcast %cst_4 : f32 to vector<8x1xf32>
    %14 = arith.divf %12, %13 : vector<8x1xf32>
    %cst_5 = arith.constant 9.99999974E-6 : f32
    %15 = vector.broadcast %cst_5 : f32 to vector<8x1xf32>
    %16 = arith.addf %14, %15 : vector<8x1xf32>
    %17 = math.rsqrt %16 : vector<8x1xf32>
    %18 = vector.broadcast %17 : vector<8x1xf32> to vector<8x128xf32>
    %19 = arith.mulf %9, %18 : vector<8x128xf32>
    %20 = arith.index_cast %arg1 : i32 to index
    %c0_6 = arith.constant 0 : index
    %c0_7 = arith.constant 0 : index
    %21 = vector.load %arg3[%20, %c0_6, %c0_7] : memref<2x1x128xf32, #tpu.memory_space<vmem>>, vector<1x1x128xf32>
    %22 = vector.shape_cast %21 : vector<1x1x128xf32> to vector<1x128xf32>
    %23 = vector.broadcast %22 : vector<1x128xf32> to vector<8x128xf32>
    %24 = arith.mulf %19, %23 : vector<8x128xf32>
    %25 = arith.index_cast %arg1 : i32 to index
    %c0_8 = arith.constant 0 : index
    %c0_9 = arith.constant 0 : index
    %26 = vector.load %arg4[%25, %c0_8, %c0_9] : memref<2x1x128xf32, #tpu.memory_space<vmem>>, vector<1x1x128xf32>
    %27 = vector.shape_cast %26 : vector<1x1x128xf32> to vector<1x128xf32>
    %28 = vector.broadcast %27 : vector<1x128xf32> to vector<8x128xf32>
    %29 = arith.addf %24, %28 : vector<8x128xf32>
    %30 = arith.index_cast %arg1 : i32 to index
    %c0_10 = arith.constant 0 : index
    %c0_11 = arith.constant 0 : index
    %31 = vector.load %arg5[%30, %c0_10, %c0_11] : memref<2x128x256xbf16, #tpu.memory_space<vmem>>, vector<1x128x256xbf16>
    %32 = vector.shape_cast %31 : vector<1x128x256xbf16> to vector<128x256xbf16>
    %33 = arith.index_cast %arg1 : i32 to index
    %c0_12 = arith.constant 0 : index
    %c0_13 = arith.constant 0 : index
    %34 = vector.load %arg7[%33, %c0_12, %c0_13] : memref<2x256x128xbf16, #tpu.memory_space<vmem>>, vector<1x256x128xbf16>
    %35 = vector.shape_cast %34 : vector<1x256x128xbf16> to vector<256x128xbf16>
    %36 = arith.truncf %29 : vector<8x128xf32> to vector<8x128xbf16>
    %cst_14 = arith.constant dense<0.000000e+00> : vector<8x256xf32>
    %37 = tpu.matmul %36, %32, %cst_14 {dimension_numbers = #tpu.dot_dimension_numbers<[1], [0], [0], [1], [0, 0, 1, 1], [], []>} : vector<8x128xbf16>, vector<128x256xbf16>, vector<8x256xf32> -> vector<8x256xf32>
    %38 = arith.index_cast %arg1 : i32 to index
    %c0_15 = arith.constant 0 : index
    %c0_16 = arith.constant 0 : index
    %39 = vector.load %arg6[%38, %c0_15, %c0_16] : memref<2x1x256xf32, #tpu.memory_space<vmem>>, vector<1x1x256xf32>
    %40 = vector.shape_cast %39 : vector<1x1x256xf32> to vector<1x256xf32>
    %41 = vector.broadcast %40 : vector<1x256xf32> to vector<8x256xf32>
    %42 = arith.addf %37, %41 : vector<8x256xf32>
    %cst_17 = arith.constant 5.000000e-01 : f32
    %43 = vector.broadcast %cst_17 : f32 to vector<8x256xf32>
    %44 = arith.mulf %43, %42 : vector<8x256xf32>
    %cst_18 = arith.constant 4.471500e-02 : f32
    %45 = vector.broadcast %cst_18 : f32 to vector<8x256xf32>
    %46 = arith.mulf %45, %42 : vector<8x256xf32>
    %47 = arith.mulf %46, %42 : vector<8x256xf32>
    %48 = arith.mulf %47, %42 : vector<8x256xf32>
    %49 = arith.addf %42, %48 : vector<8x256xf32>
    %cst_19 = arith.constant 0.797884583 : f32
    %50 = vector.broadcast %cst_19 : f32 to vector<8x256xf32>
    %51 = arith.mulf %50, %49 : vector<8x256xf32>
    %52 = math.tanh %51 : vector<8x256xf32>
    %cst_20 = arith.constant 1.000000e+00 : f32
    %53 = vector.broadcast %cst_20 : f32 to vector<8x256xf32>
    %54 = arith.addf %53, %52 : vector<8x256xf32>
    %55 = arith.mulf %44, %54 : vector<8x256xf32>
    %56 = arith.truncf %55 : vector<8x256xf32> to vector<8x256xbf16>
    %cst_21 = arith.constant dense<0.000000e+00> : vector<8x128xf32>
    %57 = tpu.matmul %56, %35, %cst_21 {dimension_numbers = #tpu.dot_dimension_numbers<[1], [0], [0], [1], [0, 0, 1, 1], [], []>} : vector<8x256xbf16>, vector<256x128xbf16>, vector<8x128xf32> -> vector<8x128xf32>
    %58 = arith.index_cast %arg1 : i32 to index
    %c0_22 = arith.constant 0 : index
    %c0_23 = arith.constant 0 : index
    %59 = vector.load %arg8[%58, %c0_22, %c0_23] : memref<2x1x128xf32, #tpu.memory_space<vmem>>, vector<1x1x128xf32>
    %60 = vector.shape_cast %59 : vector<1x1x128xf32> to vector<1x128xf32>
    %61 = vector.broadcast %60 : vector<1x128xf32> to vector<8x128xf32>
    %62 = arith.addf %57, %61 : vector<8x128xf32>
    %63 = arith.addf %3, %62 : vector<8x128xf32>
    %c0_24 = arith.constant 0 : index
    %c0_25 = arith.constant 0 : index
    %64 = vector.load %arg9[%c0_24, %c0_25] : memref<8x128xf32, #tpu.memory_space<vmem>>, vector<8x128xf32>
    tpu.vector_store %arg9[%c0_24, %c0_25], %63 {strides = array<i32>} : memref<8x128xf32, #tpu.memory_space<vmem>>, vector<8x128xf32>,
    return
  }
  func.func @transform_0(%arg0: i32, %arg1: i32) -> (i32, i32) {
    %c0_i32 = arith.constant 0 : i32
    %c0_i32_0 = arith.constant 0 : i32
    return %arg0, %c0_i32 : i32, i32
  }
  func.func @transform_1(%arg0: i32, %arg1: i32) -> (i32, i32, i32) {
    %c0_i32 = arith.constant 0 : i32
    %c0_i32_0 = arith.constant 0 : i32
    %c0_i32_1 = arith.constant 0 : i32
    %c0_i32_2 = arith.constant 0 : i32
    return %c0_i32, %c0_i32_0, %c0_i32_1 : i32, i32, i32
  }
  func.func @transform_2(%arg0: i32, %arg1: i32) -> (i32, i32, i32) {
    %c0_i32 = arith.constant 0 : i32
    %c0_i32_0 = arith.constant 0 : i32
    %c0_i32_1 = arith.constant 0 : i32
    %c0_i32_2 = arith.constant 0 : i32
    return %c0_i32, %c0_i32_0, %c0_i32_1 : i32, i32, i32
  }
  func.func @transform_3(%arg0: i32, %arg1: i32) -> (i32, i32, i32) {
    %c0_i32 = arith.constant 0 : i32
    %c0_i32_0 = arith.constant 0 : i32
    %c0_i32_1 = arith.constant 0 : i32
    %c0_i32_2 = arith.constant 0 : i32
    return %c0_i32, %c0_i32_0, %c0_i32_1 : i32, i32, i32
  }
  func.func @transform_4(%arg0: i32, %arg1: i32) -> (i32, i32, i32) {
    %c0_i32 = arith.constant 0 : i32
    %c0_i32_0 = arith.constant 0 : i32
    %c0_i32_1 = arith.constant 0 : i32
    %c0_i32_2 = arith.constant 0 : i32
    return %c0_i32, %c0_i32_0, %c0_i32_1 : i32, i32, i32
  }
  func.func @transform_5(%arg0: i32, %arg1: i32) -> (i32, i32, i32) {
    %c0_i32 = arith.constant 0 : i32
    %c0_i32_0 = arith.constant 0 : i32
    %c0_i32_1 = arith.constant 0 : i32
    %c0_i32_2 = arith.constant 0 : i32
    return %c0_i32, %c0_i32_0, %c0_i32_1 : i32, i32, i32
  }
  func.func @transform_6(%arg0: i32, %arg1: i32) -> (i32, i32, i32) {
    %c0_i32 = arith.constant 0 : i32
    %c0_i32_0 = arith.constant 0 : i32
    %c0_i32_1 = arith.constant 0 : i32
    %c0_i32_2 = arith.constant 0 : i32
    return %c0_i32, %c0_i32_0, %c0_i32_1 : i32, i32, i32
  }
  func.func @transform_7(%arg0: i32, %arg1: i32) -> (i32, i32) {
    %c0_i32 = arith.constant 0 : i32
    %c0_i32_0 = arith.constant 0 : i32
    return %arg0, %c0_i32 : i32, i32
  }
}

</mosaic_0001>

<llo_original>
// kernel: _ffn_stack_call.1
$region0: #{_ffn_stack_call.1}
  #allocation0 [shape = 'u32[]', space=smem, size = 0x4, offset = 0x4, fixed_abs, tag = 'smem constant byte address 0x4 - core index']
  #allocation1 [shape = 'u32[144,128]{1,0:T(1,128)}', space=vmem, size = 0x12000, scoped, tag = 'internal scratch']
  %s0 = inlined_call_operand.hbm [shape: f32[16,128], index: 0, kind: input, shape index: {}]
  %s1 = inlined_call_operand.vmem [shape: f32[2,1,128], index: 1, kind: input, shape index: {}]
  %s2 = inlined_call_operand.hbm [shape: f32[2,1,128], index: 2, kind: input, shape index: {}]
  %s3 = inlined_call_operand.hbm [shape: bf16[2,128,256], index: 3, kind: input, shape index: {}]
  %s4 = inlined_call_operand.vmem [shape: f32[2,1,256], index: 4, kind: input, shape index: {}]
  %s5 = inlined_call_operand.hbm [shape: bf16[2,256,128], index: 5, kind: input, shape index: {}]
  %s6 = inlined_call_operand.vmem [shape: f32[2,1,128], index: 6, kind: input, shape index: {}]
  %s7 = inlined_call_operand.hbm [shape: f32[16,128], index: 7, kind: output, shape index: {}]
  %s8 = sld [smem:[#allocation0]]
  $region81: #{_ffn_stack_call.1} parent=0
    _
  %s10 = ssub.s32 1, %s8
  %s11 = scalar_select 0, %s10, %s8
  $region1: #{_ffn_stack_call.1} parent=0
    #allocation2 [shape = 'u8[8192]{0}', space=vmem, size = 0x2000, scoped, tag = 'input window, operand 0']
    #allocation3 [shape = 's32[2]{0}', space=sflag, size = 0x8, scoped, tag = 'scoped memory for _ffn_stack_call.1']
    #allocation4 [shape = 's32[2]{0}', space=sflag, size = 0x8, scoped, tag = 'scoped memory for _ffn_stack_call.1']
    #allocation5 [shape = 'u8[1024]{0}', space=vmem, size = 0x400, scoped, tag = 'input window, operand 2, single buffered']
    #allocation6 [shape = 's32[1]{0}', space=sflag, size = 0x4, scoped, tag = 'scoped memory for _ffn_stack_call.1']
    #allocation7 [shape = 'u8[131072]{0}', space=vmem, size = 0x20000, scoped, tag = 'input window, operand 3, single buffered']
    #allocation8 [shape = 'u8[131072]{0}', space=vmem, size = 0x20000, scoped, tag = 'input window, operand 5, single buffered']
    #allocation9 [shape = 's32[1]{0}', space=sflag, size = 0x4, scoped, tag = 'scoped memory for _ffn_stack_call.1']
    #allocation10 [shape = 'u8[8192]{0}', space=vmem, size = 0x2000, scoped, tag = 'output window, operand 0']
    %12 = vsyncpa [#allocation3], 0
    %s13 = scalar_lea.sflag [#allocation3], 1
    %14 = vsyncpa %s13, 0
    %15 = vsyncpa [#allocation6], 0
    %16 = vsyncpa [#allocation9], 0
    %17 = vsyncpa [#allocation4], 0
    %s18 = scalar_lea.sflag [#allocation4], 1
    %19 = vsyncpa %s18, 0
    loop: start=0, step=1, limit=6
    $region2: #{_ffn_stack_call.1} parent=1 // loop_pre_header
      _
    $region3: #{_ffn_stack_call.1} parent=1 // loop_header
      %s21 = sphi 0, %s25
      %p22 = scmp.ge.s32.totalorder %s21, 6
      %s28 = sphi 0, %s40
      %s29 = sphi 0, %s36
      %s30 = sphi 0, %s28
      %s31 = sphi 0, %s29
      %s32 = sphi 0, %s30
      %s33 = sphi 0, %s31
      %s43 = sphi 0, %s45
      %s46 = sphi 0, %s43
      %s47 = sphi 0, %s46
      %s63 = sphi 0, %s47
      %s67 = sphi 0, %s67
      %s69 = sphi 0, %s67
      %s70 = sphi 0, %s69
      %s84 = sphi 0, %s70
      %s88 = sphi 0, %s88
      %s90 = sphi 0, %s88
      %s91 = sphi 0, %s90
      %s105 = sphi 0, %s91
      %s109 = sphi 0, %s109
      %s111 = sphi 0, %s109
      %s112 = sphi 0, %s111
      %s126 = sphi 0, %s112
      %s130 = sphi 0, %s130
      %s132 = sphi 0, %s130
      %s133 = sphi 0, %s132
      %s147 = sphi 0, %s133
      %s151 = sphi 0, %s151
      %s153 = sphi 0, %s151
      %s154 = sphi 0, %s153
      %s168 = sphi 0, %s154
      %s172 = sphi 0, %s172
      %s174 = sphi 0, %s172
      %s175 = sphi 0, %s174
      %s189 = sphi 0, %s175
      %s195 = sphi 0, %s197
      %s198 = sphi 0, %s195
      %s199 = sphi 0, %s198
      %s215 = sphi 0, %s199
    $region4: #{_ffn_stack_call.1} parent=1 // loop_header_branch
      %24 = sbr.rel (%p22) target = $region8
    $region5: #{_ffn_stack_call.1} parent=1 // loop_body
      %s26 = ssub.s32 %s21, 1
      %s27 = ssub.s32 %s21, 2
      %s34 = sadd.s32 1, %s29
      %p35 = scmp.ge.s32.totalorder %s34, 2
      %s36 = scalar_select %p35, 0, %s34
      %s37 = sadd.s32 1, %s28
      %s38 = scalar_select %p35, %s37, %s28
      %p39 = scmp.ge.s32.totalorder %s38, 2
      %s40 = scalar_select %p39, 0, %s38
      %s41 = ssub.s32 %s28, %s40
      %p42 = scmp.eq.s32.totalorder %s41, 0
      %s44 = sadd.s32 %s43, 1
      %s45 = scalar_select %p42, %s43, %s44
      %p48 = pneg %p42
      %p49 = scmp.eq.s32.totalorder %s21, 3
      %p50 = por %p48, %p49
      %p51 = scmp.ne.s32.totalorder %s43, %s46
      %p52 = scmp.eq.s32.totalorder %s21, 0
      %p53 = por %p51, %p52
      %p54 = scmp.ne.s32.totalorder %s43, %s46
      %p55 = scmp.eq.s32.totalorder %s26, 3
      %p56 = por %p54, %p55
      %p57 = scmp.ne.s32.totalorder %s46, %s47
      %p58 = scmp.eq.s32.totalorder %s26, 0
      %p59 = por %p57, %p58
      %p60 = scmp.ne.s32.totalorder %s46, %s47
      %p61 = scmp.eq.s32.totalorder %s27, 3
      %p62 = por %p60, %p61
      %p64 = scmp.ne.s32.totalorder %s47, %s63
      %p65 = scmp.eq.s32.totalorder %s27, 0
      %p66 = por %p64, %p65
      %s68 = sadd.s32 %s67, 1
      %p71 = scmp.eq.s32.totalorder %s21, 3
      %p72 = scmp.ne.s32.totalorder %s67, %s69
      %p73 = scmp.eq.s32.totalorder %s21, 0
      %p74 = por %p72, %p73
      %p75 = scmp.ne.s32.totalorder %s67, %s69
      %p76 = scmp.eq.s32.totalorder %s26, 3
      %p77 = por %p75, %p76
      %p78 = scmp.ne.s32.totalorder %s69, %s70
      %p79 = scmp.eq.s32.totalorder %s26, 0
      %p80 = por %p78, %p79
      %p81 = scmp.ne.s32.totalorder %s69, %s70
      %p82 = scmp.eq.s32.totalorder %s27, 3
      %p83 = por %p81, %p82
      %p85 = scmp.ne.s32.totalorder %s70, %s84
      %p86 = scmp.eq.s32.totalorder %s27, 0
      %p87 = por %p85, %p86
      %s89 = sadd.s32 %s88, 1
      %p92 = scmp.eq.s32.totalorder %s21, 3
      %p93 = scmp.ne.s32.totalorder %s88, %s90
      %p94 = scmp.eq.s32.totalorder %s21, 0
      %p95 = por %p93, %p94
      %p96 = scmp.ne.s32.totalorder %s88, %s90
      %p97 = scmp.eq.s32.totalorder %s26, 3
      %p98 = por %p96, %p97
      %p99 = scmp.ne.s32.totalorder %s90, %s91
      %p100 = scmp.eq.s32.totalorder %s26, 0
      %p101 = por %p99, %p100
      %p102 = scmp.ne.s32.totalorder %s90, %s91
      %p103 = scmp.eq.s32.totalorder %s27, 3
      %p104 = por %p102, %p103
      %p106 = scmp.ne.s32.totalorder %s91, %s105
      %p107 = scmp.eq.s32.totalorder %s27, 0
      %p108 = por %p106, %p107
      %s110 = sadd.s32 %s109, 1
      %p113 = scmp.eq.s32.totalorder %s21, 3
      %p114 = scmp.ne.s32.totalorder %s109, %s111
      %p115 = scmp.eq.s32.totalorder %s21, 0
      %p116 = por %p114, %p115
      %p117 = scmp.ne.s32.totalorder %s109, %s111
      %p118 = scmp.eq.s32.totalorder %s26, 3
      %p119 = por %p117, %p118
      %p120 = scmp.ne.s32.totalorder %s111, %s112
      %p121 = scmp.eq.s32.totalorder %s26, 0
      %p122 = por %p120, %p121
      %p123 = scmp.ne.s32.totalorder %s111, %s112
      %p124 = scmp.eq.s32.totalorder %s27, 3
      %p125 = por %p123, %p124
      %p127 = scmp.ne.s32.totalorder %s112, %s126
      %p128 = scmp.eq.s32.totalorder %s27, 0
      %p129 = por %p127, %p128
      %s131 = sadd.s32 %s130, 1
      %p134 = scmp.eq.s32.totalorder %s21, 3
      %p135 = scmp.ne.s32.totalorder %s130, %s132
      %p136 = scmp.eq.s32.totalorder %s21, 0
      %p137 = por %p135, %p136
      %p138 = scmp.ne.s32.totalorder %s130, %s132
      %p139 = scmp.eq.s32.totalorder %s26, 3
      %p140 = por %p138, %p139
      %p141 = scmp.ne.s32.totalorder %s132, %s133
      %p142 = scmp.eq.s32.totalorder %s26, 0
      %p143 = por %p141, %p142
      %p144 = scmp.ne.s32.totalorder %s132, %s133
      %p145 = scmp.eq.s32.totalorder %s27, 3
      %p146 = por %p144, %p145
      %p148 = scmp.ne.s32.totalorder %s133, %s147
      %p149 = scmp.eq.s32.totalorder %s27, 0
      %p150 = por %p148, %p149
      %s152 = sadd.s32 %s151, 1
      %p155 = scmp.eq.s32.totalorder %s21, 3
      %p156 = scmp.ne.s32.totalorder %s151, %s153
      %p157 = scmp.eq.s32.totalorder %s21, 0
      %p158 = por %p156, %p157
      %p159 = scmp.ne.s32.totalorder %s151, %s153
      %p160 = scmp.eq.s32.totalorder %s26, 3
      %p161 = por %p159, %p160
      %p162 = scmp.ne.s32.totalorder %s153, %s154
      %p163 = scmp.eq.s32.totalorder %s26, 0
      %p164 = por %p162, %p163
      %p165 = scmp.ne.s32.totalorder %s153, %s154
      %p166 = scmp.eq.s32.totalorder %s27, 3
      %p167 = por %p165, %p166
      %p169 = scmp.ne.s32.totalorder %s154, %s168
      %p170 = scmp.eq.s32.totalorder %s27, 0
      %p171 = por %p169, %p170
      %s173 = sadd.s32 %s172, 1
      %p176 = scmp.eq.s32.totalorder %s21, 3
      %p177 = scmp.ne.s32.totalorder %s172, %s174
      %p178 = scmp.eq.s32.totalorder %s21, 0
      %p179 = por %p177, %p178
      %p180 = scmp.ne.s32.totalorder %s172, %s174
      %p181 = scmp.eq.s32.totalorder %s26, 3
      %p182 = por %p180, %p181
      %p183 = scmp.ne.s32.totalorder %s174, %s175
      %p184 = scmp.eq.s32.totalorder %s26, 0
      %p185 = por %p183, %p184
      %p186 = scmp.ne.s32.totalorder %s174, %s175
      %p187 = scmp.eq.s32.totalorder %s27, 3
      %p188 = por %p186, %p187
      %p190 = scmp.ne.s32.totalorder %s175, %s189
      %p191 = scmp.eq.s32.totalorder %s27, 0
      %p192 = por %p190, %p191
      %s193 = ssub.s32 %s28, %s40
      %p194 = scmp.eq.s32.totalorder %s193, 0
      %s196 = sadd.s32 %s195, 1
      %s197 = scalar_select %p194, %s195, %s196
      %p200 = pneg %p194
      %p201 = scmp.eq.s32.totalorder %s21, 3
      %p202 = por %p200, %p201
      %p203 = scmp.ne.s32.totalorder %s195, %s198
      %p204 = scmp.eq.s32.totalorder %s21, 0
      %p205 = por %p203, %p204
      %p206 = scmp.ne.s32.totalorder %s195, %s198
      %p207 = scmp.eq.s32.totalorder %s26, 3
      %p208 = por %p206, %p207
      %p209 = scmp.ne.s32.totalorder %s198, %s199
      %p210 = scmp.eq.s32.totalorder %s26, 0
      %p211 = por %p209, %p210
      %p212 = scmp.ne.s32.totalorder %s198, %s199
      %p213 = scmp.eq.s32.totalorder %s27, 3
      %p214 = por %p212, %p213
      %p216 = scmp.ne.s32.totalorder %s199, %s215
      %p217 = scmp.eq.s32.totalorder %s27, 0
      %p218 = por %p216, %p217
      %p219 = scmp.le.s32.totalorder 1, %s21
      %p220 = scmp.lt.s32.totalorder %s21, 5
      %p221 = pnand %p219, %p220
      %p222 = pneg %p221
      // Predicated region
      $region9: #{_ffn_stack_call.1} parent=5 // pred_check
        _
      $region10: #{_ffn_stack_call.1} parent=5 // pred_check_branch
        %224 = sbr.rel (%p221) target = $region12
      $region11: #{_ffn_stack_call.1} parent=5 // pred_region
        %s225 = ssub.s32 %s21, 1
        // Predicated region
        $region13: #{_ffn_stack_call.1} parent=11 // pred_check
          %p226 = pneg %p80
        $region14: #{_ffn_stack_call.1} parent=11 // pred_check_branch
          %228 = sbr.rel (%p226) target = $region16
        $region15: #{_ffn_stack_call.1} parent=11 // pred_region
          _
        $region16: #{_ffn_stack_call.1} parent=11 // pred_fallthru
          _
        // Predicated region
        $region17: #{_ffn_stack_call.1} parent=11 // pred_check
          %p229 = pneg %p101
        $region18: #{_ffn_stack_call.1} parent=11 // pred_check_branch
          %231 = sbr.rel (%p229) target = $region20
        $region19: #{_ffn_stack_call.1} parent=11 // pred_region
          %s233 = ssub.s32 32, 32
          %234 = vsyncadd [#allocation6], %s233
          %s235 = sshll.u32 [#allocation5], 4
          %s236 = int_to_ptr.vmem [resolvable:$true] %s235
          %241 = dma.hbm_to_vmem [thread:$0]  %s2, 32, %s236, [#allocation6], 16, 16, 1
        $region20: #{_ffn_stack_call.1} parent=11 // pred_fallthru
          _
        // Predicated region
        $region21: #{_ffn_stack_call.1} parent=11 // pred_check
          %p242 = pneg %p122
        $region22: #{_ffn_stack_call.1} parent=11 // pred_check_branch
          %244 = sbr.rel (%p242) target = $region24
        $region23: #{_ffn_stack_call.1} parent=11 // pred_region
          %s246 = ssub.s32 4096, 4096
          %247 = vsyncadd [#allocation6], %s246
          %s248 = sshll.u32 [#allocation7], 4
          %s249 = int_to_ptr.vmem [resolvable:$true] %s248
          %254 = dma.hbm_to_vmem [thread:$0]  %s3, 4096, %s249, [#allocation6], 128, 128, 8
        $region24: #{_ffn_stack_call.1} parent=11 // pred_fallthru
          _
        // Predicated region
        $region25: #{_ffn_stack_call.1} parent=11 // pred_check
          %p255 = pneg %p143
        $region26: #{_ffn_stack_call.1} parent=11 // pred_check_branch
          %257 = sbr.rel (%p255) target = $region28
        $region27: #{_ffn_stack_call.1} parent=11 // pred_region
          _
        $region28: #{_ffn_stack_call.1} parent=11 // pred_fallthru
          _
        // Predicated region
        $region29: #{_ffn_stack_call.1} parent=11 // pred_check
          %p258 = pneg %p164
        $region30: #{_ffn_stack_call.1} parent=11 // pred_check_branch
          %260 = sbr.rel (%p258) target = $region32
        $region31: #{_ffn_stack_call.1} parent=11 // pred_region
          %s262 = ssub.s32 4096, 4096
          %263 = vsyncadd [#allocation9], %s262
          %s264 = sshll.u32 [#allocation8], 4
          %s265 = int_to_ptr.vmem [resolvable:$true] %s264
          %270 = dma.hbm_to_vmem [thread:$0]  %s5, 4096, %s265, [#allocation9], 64, 64, 4
        $region32: #{_ffn_stack_call.1} parent=11 // pred_fallthru
          _
        // Predicated region
        $region33: #{_ffn_stack_call.1} parent=11 // pred_check
          %p271 = pneg %p185
        $region34: #{_ffn_stack_call.1} parent=11 // pred_check_branch
          %273 = sbr.rel (%p271) target = $region36
        $region35: #{_ffn_stack_call.1} parent=11 // pred_region
          _
        $region36: #{_ffn_stack_call.1} parent=11 // pred_fallthru
          _
      $region12: #{_ffn_stack_call.1} parent=5 // pred_fallthru
        _
      %p274 = scmp.lt.s32.totalorder %s21, 4
      // Predicated region
      $region37: #{_ffn_stack_call.1} parent=5 // pred_check
        %p275 = pneg %p274
      $region38: #{_ffn_stack_call.1} parent=5 // pred_check_branch
        %277 = sbr.rel (%p275) target = $region40
      $region39: #{_ffn_stack_call.1} parent=5 // pred_region
        // Predicated region
        $region41: #{_ffn_stack_call.1} parent=39 // pred_check
          %p278 = pneg %p53
        $region42: #{_ffn_stack_call.1} parent=39 // pred_check_branch
          %280 = sbr.rel (%p278) target = $region44
        $region43: #{_ffn_stack_call.1} parent=39 // pred_region
          %s281 = sand.u32 %s43, 1
          %s282 = scalar_lea.sflag [#allocation3], %s281
          %s283 = sand.u32 %s43, 1
          %s284 = smul.addr %s283, 8
          %s285 = scalar_lea.vmem [#allocation2], %s284
          %s287 = ssub.s32 128, 128
          %288 = vsyncadd %s282, %s287
          %s289 = smul.addr %s28, 128
          %s290 = scalar_lea.hbm %s0, %s289
          %s292 = sshll.u32 %s285, 4
          %s293 = int_to_ptr.vmem [resolvable:$true] %s292
          %295 = dma.hbm_to_vmem [thread:$0]  %s290, 128, %s293, %s282
        $region44: #{_ffn_stack_call.1} parent=39 // pred_fallthru
          _
      $region40: #{_ffn_stack_call.1} parent=5 // pred_fallthru
        _
      %p296 = scmp.le.s32.totalorder 1, %s21
      %p297 = scmp.lt.s32.totalorder %s21, 5
      %p298 = pnand %p296, %p297
      %p299 = pneg %p298
      // Predicated region
      $region45: #{_ffn_stack_call.1} parent=5 // pred_check
        _
      $region46: #{_ffn_stack_call.1} parent=5 // pred_check_branch
        %301 = sbr.rel (%p298) target = $region48
      $region47: #{_ffn_stack_call.1} parent=5 // pred_region
        %s302 = ssub.s32 %s21, 1
        %s303 = sand.u32 %s46, 1
        %s304 = scalar_lea.sflag [#allocation3], %s303
        %s305 = sand.u32 %s46, 1
        %s306 = smul.addr %s305, 8
        %s307 = scalar_lea.vmem [#allocation2], %s306
        // Predicated region
        $region49: #{_ffn_stack_call.1} parent=47 // pred_check
          %p308 = pneg %p59
        $region50: #{_ffn_stack_call.1} parent=47 // pred_check_branch
          %310 = sbr.rel (%p308) target = $region52
        $region51: #{_ffn_stack_call.1} parent=47 // pred_region
          %311 = dma.done %s304, 128
        $region52: #{_ffn_stack_call.1} parent=47 // pred_fallthru
          _
        // Predicated region
        $region53: #{_ffn_stack_call.1} parent=47 // pred_check
          %p312 = pneg %p101
        $region54: #{_ffn_stack_call.1} parent=47 // pred_check_branch
          %314 = sbr.rel (%p312) target = $region56
        $region55: #{_ffn_stack_call.1} parent=47 // pred_region
          %315 = dma.done [#allocation6], 32
        $region56: #{_ffn_stack_call.1} parent=47 // pred_fallthru
          _
        // Predicated region
        $region57: #{_ffn_stack_call.1} parent=47 // pred_check
          %p316 = pneg %p122
        $region58: #{_ffn_stack_call.1} parent=47 // pred_check_branch
          %318 = sbr.rel (%p316) target = $region60
        $region59: #{_ffn_stack_call.1} parent=47 // pred_region
          %319 = dma.done [#allocation6], 4096
        $region60: #{_ffn_stack_call.1} parent=47 // pred_fallthru
          _
        // Predicated region
        $region61: #{_ffn_stack_call.1} parent=47 // pred_check
          %p320 = pneg %p164
        $region62: #{_ffn_stack_call.1} parent=47 // pred_check_branch
          %322 = sbr.rel (%p320) target = $region64
        $region63: #{_ffn_stack_call.1} parent=47 // pred_region
          %323 = dma.done [#allocation9], 4096
        $region64: #{_ffn_stack_call.1} parent=47 // pred_fallthru
          _
        %s324 = sand.u32 %s46, 1
        %s325 = scalar_lea.sflag [#allocation3], %s324
        %s326 = sand.u32 %s46, 1
        %s327 = smul.addr %s326, 8
        %s328 = scalar_lea.vmem [#allocation2], %s327
        %p329 = pneg %p59
        %p330 = pneg %p56
        %p331 = pneg %p80
        %p332 = pneg %p77
        %p333 = pneg %p101
        %p334 = pneg %p98
        %p335 = pneg %p122
        %p336 = pneg %p119
        %p337 = pneg %p143
        %p338 = pneg %p140
        %p339 = pneg %p164
        %p340 = pneg %p161
        %p341 = pneg %p185
        %p342 = pneg %p182
        %p343 = pneg %p211
        %p344 = pneg %p208
        %s345 = sand.u32 %s198, 1
        %s346 = scalar_lea.sflag [#allocation4], %s345
        %s347 = sand.u32 %s198, 1
        %s348 = smul.addr %s347, 8
        %s349 = scalar_lea.vmem [#allocation10], %s348
        %p351 = scmp.eq.s32.totalorder %s31, 0
        // Predicated region
        $region65: #{_ffn_stack_call.1} parent=47 // pred_check
          %p352 = pneg %p351
        $region66: #{_ffn_stack_call.1} parent=47 // pred_check_branch
          %354 = sbr.rel (%p352) target = $region68
        $region67: #{_ffn_stack_call.1} parent=47 // pred_region
          %v355 = vld [vmem:[%s307] sm:$0xff]
          %356 = vst [vmem:[%s349] sm:$0xff] %v355
        $region68: #{_ffn_stack_call.1} parent=47 // pred_fallthru
          _
        %v357 = vld [vmem:[%s349] sm:$0xff]
        %358 = vadd.xlane.f32.xlu0 %v357
        %v359 = vpop.xlane.xlu0 %358
        %v360 = vrcp.pop 128.0
        %v361 = vmul.f32 %v359, %v360
        %v362 = vsub.f32 %v357, %v361
        %v363 = vmul.f32 %v362, %v362
        %364 = vadd.xlane.f32.xlu0 %v363
        %v365 = vpop.xlane.xlu0 %364
        %v366 = vmul.f32 %v365, %v360
        %v367 = vadd.f32 %v366, 1e-05
        %v368 = vrsqrt.pop %v367
        %v369 = vmul.f32 %v362, %v368
        %s370 = scalar_lea.vmem %s1, %s31
        %v371 = vld [vmem:[%s370] sm:$0x1]
        %v373 = vlaneseq
        %v374 = vshrl.u32 %v373, 7
        %v375 = vsub.s32 0, %v374
        %v376 = vrot.slane %v371, %v375
        %v378 = vmul.f32 %v369, %v376
        %s379 = scalar_lea.vmem [#allocation5], %s31
        %v380 = vld [vmem:[%s379] sm:$0x1]
        %v382 = vlaneseq
        %v383 = vshrl.u32 %v382, 7
        %v384 = vsub.s32 0, %v383
        %v385 = vrot.slane %v380, %v384
        %v387 = vadd.f32 %v378, %v385
        %s388 = smul.u32 %s31, 32
        %s389 = smul.addr %s388, 4
        %s390 = scalar_lea.vmem [#allocation7], %s389
        %v391 = vld [vmem:[%s390] sm:$0xff]
        %v392 = vld [vmem:[%s390 + $0x8] sm:$0xff]
        %v393 = vld [vmem:[%s390 + $0x10] sm:$0xff]
        %v394 = vld [vmem:[%s390 + $0x18] sm:$0xff]
        %v395 = vld [vmem:[%s390 + $0x20] sm:$0xff]
        %v396 = vld [vmem:[%s390 + $0x28] sm:$0xff]
        %v397 = vld [vmem:[%s390 + $0x30] sm:$0xff]
        %v398 = vld [vmem:[%s390 + $0x38] sm:$0xff]
        %v399 = vld [vmem:[%s390 + $0x40] sm:$0xff]
        %v400 = vld [vmem:[%s390 + $0x48] sm:$0xff]
        %v401 = vld [vmem:[%s390 + $0x50] sm:$0xff]
        %v402 = vld [vmem:[%s390 + $0x58] sm:$0xff]
        %v403 = vld [vmem:[%s390 + $0x60] sm:$0xff]
        %v404 = vld [vmem:[%s390 + $0x68] sm:$0xff]
        %v405 = vld [vmem:[%s390 + $0x70] sm:$0xff]
        %v406 = vld [vmem:[%s390 + $0x78] sm:$0xff]
        %s407 = smul.addr %s388, 4
        %s408 = scalar_lea.vmem [#allocation8], %s407
        %v409 = vld [vmem:[%s408] sm:$0xf]
        %v410 = vld [vmem:[%s408 + $0x4] sm:$0xf]
        %v411 = vld [vmem:[%s408 + $0x8] sm:$0xf]
        %v412 = vld [vmem:[%s408 + $0xc] sm:$0xf]
        %v413 = vld [vmem:[%s408 + $0x10] sm:$0xf]
        %v414 = vld [vmem:[%s408 + $0x14] sm:$0xf]
        %v415 = vld [vmem:[%s408 + $0x18] sm:$0xf]
        %v416 = vld [vmem:[%s408 + $0x1c] sm:$0xf]
        %v417 = vld [vmem:[%s408 + $0x20] sm:$0xf]
        %v418 = vld [vmem:[%s408 + $0x24] sm:$0xf]
        %v419 = vld [vmem:[%s408 + $0x28] sm:$0xf]
        %v420 = vld [vmem:[%s408 + $0x2c] sm:$0xf]
        %v421 = vld [vmem:[%s408 + $0x30] sm:$0xf]
        %v422 = vld [vmem:[%s408 + $0x34] sm:$0xf]
        %v423 = vld [vmem:[%s408 + $0x38] sm:$0xf]
        %v424 = vld [vmem:[%s408 + $0x3c] sm:$0xf]
        %v425 = vld [vmem:[%s408 + $0x40] sm:$0xf]
        %v426 = vld [vmem:[%s408 + $0x44] sm:$0xf]
        %v427 = vld [vmem:[%s408 + $0x48] sm:$0xf]
        %v428 = vld [vmem:[%s408 + $0x4c] sm:$0xf]
        %v429 = vld [vmem:[%s408 + $0x50] sm:$0xf]
        %v430 = vld [vmem:[%s408 + $0x54] sm:$0xf]
        %v431 = vld [vmem:[%s408 + $0x58] sm:$0xf]
        %v432 = vld [vmem:[%s408 + $0x5c] sm:$0xf]
        %v433 = vld [vmem:[%s408 + $0x60] sm:$0xf]
        %v434 = vld [vmem:[%s408 + $0x64] sm:$0xf]
        %v435 = vld [vmem:[%s408 + $0x68] sm:$0xf]
        %v436 = vld [vmem:[%s408 + $0x6c] sm:$0xf]
        %v437 = vld [vmem:[%s408 + $0x70] sm:$0xf]
        %v438 = vld [vmem:[%s408 + $0x74] sm:$0xf]
        %v439 = vld [vmem:[%s408 + $0x78] sm:$0xf]
        %v440 = vld [vmem:[%s408 + $0x7c] sm:$0xf]
        %v441 = vpack.c.bf16 %v387, %v387
        %s442 = smul.u32 %s31, 2
        %s443 = scalar_lea.vmem %s4, %s442
        %v444 = vld [vmem:[%s443] sm:$0x3]
        %v446 = vlaneseq
        %v447 = vshrl.u32 %v446, 7
        %v448 = vsub.s32 0, %v447
        %v449 = vrot.slane %v444, %v448
        %v450 = vlaneseq
        %v451 = vshrl.u32 %v450, 7
        %v452 = vsub.s32 1, %v451
        %v453 = vrot.slane %v444, %v452
        %v472 = vunpack.c.l.b16 %v391
        %v473 = vunpack.c.h.b16 %v391
        %v474 = vunpack.c.l.b16 %v392
        %v475 = vunpack.c.h.b16 %v392
        %v476 = vunpack.c.l.b16 %v393
        %v477 = vunpack.c.h.b16 %v393
        %v478 = vunpack.c.l.b16 %v394
        %v479 = vunpack.c.h.b16 %v394
        %v480 = vunpack.c.l.b16 %v395
        %v481 = vunpack.c.h.b16 %v395
        %v482 = vunpack.c.l.b16 %v396
        %v483 = vunpack.c.h.b16 %v396
        %v484 = vunpack.c.l.b16 %v397
        %v485 = vunpack.c.h.b16 %v397
        %v486 = vunpack.c.l.b16 %v398
        %v487 = vunpack.c.h.b16 %v398
        %v488 = vunpack.c.l.b16 %v399
        %v489 = vunpack.c.h.b16 %v399
        %v490 = vunpack.c.l.b16 %v400
        %v491 = vunpack.c.h.b16 %v400
        %v492 = vunpack.c.l.b16 %v401
        %v493 = vunpack.c.h.b16 %v401
        %v494 = vunpack.c.l.b16 %v402
        %v495 = vunpack.c.h.b16 %v402
        %v496 = vunpack.c.l.b16 %v403
        %v497 = vunpack.c.h.b16 %v403
        %v498 = vunpack.c.l.b16 %v404
        %v499 = vunpack.c.h.b16 %v404
        %v500 = vunpack.c.l.b16 %v405
        %v501 = vunpack.c.h.b16 %v405
        %v502 = vunpack.c.l.b16 %v406
        %v503 = vunpack.c.h.b16 %v406
        %v504 = vpack.c.b16 %v474, %v472
        %v505 = vpack.c.b16 %v475, %v473
        %v506 = vpack.c.b16 %v478, %v476
        %v507 = vpack.c.b16 %v479, %v477
        %v508 = vpack.c.b16 %v482, %v480
        %v509 = vpack.c.b16 %v483, %v481
        %v510 = vpack.c.b16 %v486, %v484
        %v511 = vpack.c.b16 %v487, %v485
        %v512 = vpack.c.b16 %v490, %v488
        %v513 = vpack.c.b16 %v491, %v489
        %v514 = vpack.c.b16 %v494, %v492
        %v515 = vpack.c.b16 %v495, %v493
        %v516 = vpack.c.b16 %v498, %v496
        %v517 = vpack.c.b16 %v499, %v497
        %v518 = vpack.c.b16 %v502, %v500
        %v519 = vpack.c.b16 %v503, %v501
        %536 = vmatprep.subr.bf16.mxu0 %v505
        %537 = vmatpush1.bf16.msra.mxu0 %v504
        %538 = vmatprep.subr.bf16.mxu0 %v507
        %539 = vmatpush1.bf16.msra.mxu0 %v506
        %540 = vmatprep.subr.bf16.mxu0 %v509
        %541 = vmatpush1.bf16.msra.mxu0 %v508
        %542 = vmatprep.subr.bf16.mxu0 %v511
        %543 = vmatpush1.bf16.msra.mxu0 %v510
        %544 = vmatprep.subr.bf16.mxu0 %v513
        %545 = vmatpush1.bf16.msra.mxu0 %v512
        %546 = vmatprep.subr.bf16.mxu0 %v515
        %547 = vmatpush1.bf16.msra.mxu0 %v514
        %548 = vmatprep.subr.bf16.mxu0 %v517
        %549 = vmatpush1.bf16.msra.mxu0 %v516
        %550 = vmatprep.subr.bf16.mxu0 %v519
        %551 = vmatpush1.bf16.msra.mxu0 %v518
        %552 = vmatprep.subr.bf16.mxu0 0
        %553 = vmatpush1.bf16.msra.mxu0 0
        %554 = vmatprep.subr.bf16.mxu0 0
        %555 = vmatpush1.bf16.msra.mxu0 0
        %556 = vmatprep.subr.bf16.mxu0 0
        %557 = vmatpush1.bf16.msra.mxu0 0
        %558 = vmatprep.subr.bf16.mxu0 0
        %559 = vmatpush1.bf16.msra.mxu0 0
        %560 = vmatprep.subr.bf16.mxu0 0
        %561 = vmatpush1.bf16.msra.mxu0 0
        %562 = vmatprep.subr.bf16.mxu0 0
        %563 = vmatpush1.bf16.msra.mxu0 0
        %564 = vmatprep.subr.bf16.mxu0 0
        %565 = vmatpush1.bf16.msra.mxu0 0
        %566 = vmatprep.subr.bf16.mxu0 0
        %567 = vmatpush1.bf16.msra.mxu0 0
        %568 = vmatprep.mubr.bf16.mxu0 0
        %569 = vmatmul.mubr.bf16.gmra.mrb[0].mxu0 %v441
        %v570 = vpop.f32.mrb[0].mxu0
        %v571 = vadd.f32 %v449, %v570
        %v572 = vpop.f32.mrb[0].mxu0
        %v573 = vadd.f32 %v453, %v572
        %v574 = vpop.f32.mrb[0].mxu0
        %v575 = vpop.f32.mrb[0].mxu0
        %576 = vdwg.mxu0
        %v577 = vmul.f32 %v571, 0.5
        %v578 = vmul.f32 %v573, 0.5
        %v579 = vmul.f32 %v571, 0.044715
        %v580 = vmul.f32 %v573, 0.044715
        %v581 = vmul.f32 %v579, %v571
        %v582 = vmul.f32 %v580, %v573
        %v583 = vmul.f32 %v581, %v571
        %v584 = vmul.f32 %v582, %v573
        %v585 = vadd.f32 %v571, %v583
        %v586 = vadd.f32 %v573, %v584
        %v587 = vmul.f32 %v585, 0.7978846
        %v588 = vmul.f32 %v586, 0.7978846
        %v589 = vtanh.pop %v587
        %v590 = vtanh.pop %v588
        %v591 = vadd.f32 %v589, 1.0
        %v592 = vadd.f32 %v590, 1.0
        %v593 = vmul.f32 %v577, %v591
        %v594 = vmul.f32 %v578, %v592
        %v595 = vpack.c.bf16 %v593, %v593
        %v596 = vpack.c.bf16 %v594, %v594
        %s597 = scalar_lea.vmem %s6, %s31
        %v598 = vld [vmem:[%s597] sm:$0x1]
        %v600 = vlaneseq
        %v601 = vshrl.u32 %v600, 7
        %v602 = vsub.s32 0, %v601
        %v603 = vrot.slane %v598, %v602
        %v637 = vunpack.c.l.b16 %v409
        %v638 = vunpack.c.l.b16 %v410
        %v639 = vunpack.c.l.b16 %v411
        %v640 = vunpack.c.l.b16 %v412
        %v641 = vunpack.c.l.b16 %v413
        %v642 = vunpack.c.l.b16 %v414
        %v643 = vunpack.c.l.b16 %v415
        %v644 = vunpack.c.l.b16 %v416
        %v645 = vunpack.c.l.b16 %v417
        %v646 = vunpack.c.l.b16 %v418
        %v647 = vunpack.c.l.b16 %v419
        %v648 = vunpack.c.l.b16 %v420
        %v649 = vunpack.c.l.b16 %v421
        %v650 = vunpack.c.l.b16 %v422
        %v651 = vunpack.c.l.b16 %v423
        %v652 = vunpack.c.l.b16 %v424
        %v653 = vunpack.c.l.b16 %v425
        %v654 = vunpack.c.l.b16 %v426
        %v655 = vunpack.c.l.b16 %v427
        %v656 = vunpack.c.l.b16 %v428
        %v657 = vunpack.c.l.b16 %v429
        %v658 = vunpack.c.l.b16 %v430
        %v659 = vunpack.c.l.b16 %v431
        %v660 = vunpack.c.l.b16 %v432
        %v661 = vunpack.c.l.b16 %v433
        %v662 = vunpack.c.l.b16 %v434
        %v663 = vunpack.c.l.b16 %v435
        %v664 = vunpack.c.l.b16 %v436
        %v665 = vunpack.c.l.b16 %v437
        %v666 = vunpack.c.l.b16 %v438
        %v667 = vunpack.c.l.b16 %v439
        %v668 = vunpack.c.l.b16 %v440
        %v669 = vpack.c.b16 %v638, %v637
        %v670 = vpack.c.b16 %v640, %v639
        %v671 = vpack.c.b16 %v642, %v641
        %v672 = vpack.c.b16 %v644, %v643
        %v673 = vpack.c.b16 %v646, %v645
        %v674 = vpack.c.b16 %v648, %v647
        %v675 = vpack.c.b16 %v650, %v649
        %v676 = vpack.c.b16 %v652, %v651
        %v677 = vpack.c.b16 %v654, %v653
        %v678 = vpack.c.b16 %v656, %v655
        %v679 = vpack.c.b16 %v658, %v657
        %v680 = vpack.c.b16 %v660, %v659
        %v681 = vpack.c.b16 %v662, %v661
        %v682 = vpack.c.b16 %v664, %v663
        %v683 = vpack.c.b16 %v666, %v665
        %v684 = vpack.c.b16 %v668, %v667
        %701 = vmatprep.subr.bf16.mxu0 0
        %702 = vmatpush1.bf16.msra.mxu0 %v669
        %703 = vmatprep.subr.bf16.mxu0 0
        %704 = vmatpush1.bf16.msra.mxu0 %v670
        %705 = vmatprep.subr.bf16.mxu0 0
        %706 = vmatpush1.bf16.msra.mxu0 %v671
        %707 = vmatprep.subr.bf16.mxu0 0
        %708 = vmatpush1.bf16.msra.mxu0 %v672
        %709 = vmatprep.subr.bf16.mxu0 0
        %710 = vmatpush1.bf16.msra.mxu0 %v673
        %711 = vmatprep.subr.bf16.mxu0 0
        %712 = vmatpush1.bf16.msra.mxu0 %v674
        %713 = vmatprep.subr.bf16.mxu0 0
        %714 = vmatpush1.bf16.msra.mxu0 %v675
        %715 = vmatprep.subr.bf16.mxu0 0
        %716 = vmatpush1.bf16.msra.mxu0 %v676
        %717 = vmatprep.subr.bf16.mxu0 0
        %718 = vmatpush1.bf16.msra.mxu0 %v677
        %719 = vmatprep.subr.bf16.mxu0 0
        %720 = vmatpush1.bf16.msra.mxu0 %v678
        %721 = vmatprep.subr.bf16.mxu0 0
        %722 = vmatpush1.bf16.msra.mxu0 %v679
        %723 = vmatprep.subr.bf16.mxu0 0
        %724 = vmatpush1.bf16.msra.mxu0 %v680
        %725 = vmatprep.subr.bf16.mxu0 0
        %726 = vmatpush1.bf16.msra.mxu0 %v681
        %727 = vmatprep.subr.bf16.mxu0 0
        %728 = vmatpush1.bf16.msra.mxu0 %v682
        %729 = vmatprep.subr.bf16.mxu0 0
        %730 = vmatpush1.bf16.msra.mxu0 %v683
        %731 = vmatprep.subr.bf16.mxu0 0
        %732 = vmatpush1.bf16.msra.mxu0 %v684
        %733 = vmatprep.mubr.bf16.mxu0 %v596
        %734 = vmatmul.mubr.bf16.gmra.mrb[0].mxu0 %v595
        %v735 = vpop.f32.mrb[0].mxu0
        %v736 = vadd.f32 %v603, %v735
        %v737 = vpop.f32.mrb[0].mxu0
        %v738 = vpop.f32.mrb[0].mxu0
        %v739 = vpop.f32.mrb[0].mxu0
        %740 = vdwg.mxu0
        %v741 = vadd.f32 %v357, %v736
        %742 = vst [vmem:[%s349] sm:$0xff] %v741
        %s743 = sand.u32 %s198, 1
        %s744 = scalar_lea.sflag [#allocation4], %s743
        %s745 = sand.u32 %s198, 1
        %s746 = smul.addr %s745, 8
        %s747 = scalar_lea.vmem [#allocation10], %s746
        // Predicated region
        $region69: #{_ffn_stack_call.1} parent=47 // pred_check
          %p748 = pneg %p208
        $region70: #{_ffn_stack_call.1} parent=47 // pred_check_branch
          %750 = sbr.rel (%p748) target = $region72
        $region71: #{_ffn_stack_call.1} parent=47 // pred_region
          %s752 = ssub.s32 128, 128
          %753 = vsyncadd %s744, %s752
          %s754 = smul.addr %s30, 128
          %s755 = scalar_lea.hbm %s7, %s754
          %s757 = sshll.u32 %s747, 4
          %s758 = int_to_ptr.vmem [resolvable:$true] %s757
          %760 = dma.vmem_to_hbm [thread:$0]  %s758, 128, %s755, %s744
        $region72: #{_ffn_stack_call.1} parent=47 // pred_fallthru
          _
      $region48: #{_ffn_stack_call.1} parent=5 // pred_fallthru
        _
      %p761 = scmp.le.s32.totalorder 2, %s21
      // Predicated region
      $region73: #{_ffn_stack_call.1} parent=5 // pred_check
        %p762 = pneg %p761
      $region74: #{_ffn_stack_call.1} parent=5 // pred_check_branch
        %764 = sbr.rel (%p762) target = $region76
      $region75: #{_ffn_stack_call.1} parent=5 // pred_region
        %s765 = ssub.s32 %s21, 2
        // Predicated region
        $region77: #{_ffn_stack_call.1} parent=75 // pred_check
          %p766 = pneg %p214
        $region78: #{_ffn_stack_call.1} parent=75 // pred_check_branch
          %768 = sbr.rel (%p766) target = $region80
        $region79: #{_ffn_stack_call.1} parent=75 // pred_region
          %s769 = sand.u32 %s199, 1
          %s770 = scalar_lea.sflag [#allocation4], %s769
          %s771 = sand.u32 %s199, 1
          %s772 = smul.addr %s771, 8
          %s773 = scalar_lea.vmem [#allocation10], %s772
          %774 = dma.done %s770, 128
        $region80: #{_ffn_stack_call.1} parent=75 // pred_fallthru
          _
      $region76: #{_ffn_stack_call.1} parent=5 // pred_fallthru
        _
    $region6: #{_ffn_stack_call.1} parent=1 // loop_footer
      %s25 = sadd.s32 1, %s21
    $region7: #{_ffn_stack_call.1} parent=1 // loop_footer_branch
      %20 = sbr.rel target = $region3
    $region8: #{_ffn_stack_call.1} parent=1 // loop_exit
      _
    %775 = vsyncpa [#allocation3], 1
    %s776 = scalar_lea.sflag [#allocation3], 1
    %777 = vsyncpa %s776, 1
    %778 = vsyncpa [#allocation6], 1
    %779 = vsyncpa [#allocation9], 1
    %780 = vsyncpa [#allocation4], 1
    %s781 = scalar_lea.sflag [#allocation4], 1
    %782 = vsyncpa %s781, 1

</llo_original>
